<compile_context>
chip_gen: v7x
topology: tpu7x:2x2x1
jax: 0.10.0
libtpu: 0.0.40
codegen_flags: <defaults>
</compile_context>

<pallas_src>
import jax
import jax.numpy as jnp
from jax.experimental import pallas as pl
from jax.experimental.pallas import tpu as pltpu

_TARGET_DMAS = 8  # a handful of concurrent DMA descriptors per call


def _make_shuffle_kernel(groups, cpg, hw, chunk, n_chunks):
    """Kernel: for each group j and channel-chunk c, DMA the contiguous input
    channels [j*cpg + c0, j*cpg + c0 + cc) to output columns [j*hw, (j+1)*hw)
    at rows [c0, c0 + cc) of the (B, cpg, g*hw) transposed-layout output."""

    def kernel(x_hbm, o_hbm, sems):
        copies = []
        for j in range(groups):            # static unroll: groups is small
            for c in range(n_chunks):
                c0 = c * chunk
                cc = min(chunk, cpg - c0)
                cp = pltpu.make_async_copy(
                    # src: (B, cc, hw) -- contiguous cc*hw-element run per batch.
                    x_hbm.at[:, pl.ds(j * cpg + c0, cc), :],
                    # dst: (B, cc, hw) -- hw-element contiguous runs, stride g*hw.
                    o_hbm.at[:, pl.ds(c0, cc), pl.ds(j * hw, hw)],
                    sems.at[j, c],
                )
                cp.start()
                copies.append(cp)
        for cp in copies:                   # all DMAs already in flight
            cp.wait()

    return kernel


def channel_shuffle(x, groups):
    """ChannelShuffle forward: (B, C, H, W) -> (B, C, H, W), channels reordered
    as view(B, g, C//g, H, W).transpose(1, 2).reshape(B, C, H, W)."""
    B, C, H, W = x.shape
    assert C % groups == 0, "channels must be divisible by groups"
    cpg = C // groups
    hw = H * W

    if groups == 1 or cpg == 1:
        return x  # the permutation is the identity

    x_flat = x.reshape(B, C, hw)  # metadata-only (contiguous)

    # Chunk each group's cpg channels so roughly _TARGET_DMAS copies run
    # concurrently (more DMA-queue parallelism on all generations).
    n_chunks = min(cpg, max(1, -(-_TARGET_DMAS // groups)))
    chunk = -(-cpg // n_chunks)          # ceil(cpg / n_chunks)
    n_chunks = -(-cpg // chunk)          # actual chunk count after rounding

    out = pl.pallas_call(
        _make_shuffle_kernel(groups, cpg, hw, chunk, n_chunks),
        out_shape=jax.ShapeDtypeStruct((B, cpg, groups * hw), x.dtype),
        in_specs=[pl.BlockSpec(memory_space=pl.ANY)],   # stay in HBM, DMA manually
        out_specs=pl.BlockSpec(memory_space=pl.ANY),    # stay in HBM, DMA manually
        scratch_shapes=[pltpu.SemaphoreType.DMA((groups, n_chunks))],
        compiler_params=pltpu.CompilerParams(has_side_effects=True),
    )(x_flat)

    # (B, cpg, g*hw) viewed as (B, cpg, g, hw): merged channel index i*g + j is
    # exactly the shuffled ordering -> free reshape back to NCHW.
    return out.reshape(B, C, H, W)


def channel_shuffle_ref(x, groups):
    B, C, H, W = x.shape
    cpg = C // groups
    y = x.reshape(B, groups, cpg, H, W)
    y = jnp.transpose(y, (0, 2, 1, 3, 4))
    return y.reshape(B, C, H, W)


if __name__ == "__main__":
    key = jax.random.PRNGKey(0)
    B, C, H, W = 2, 4, 16, 16   # channels=4, groups=2 -> cpg=2
    g = 2
    x = jax.random.normal(key, (B, C, H, W), dtype=jnp.float32)

    y = channel_shuffle(x, g)
    y = jax.block_until_ready(y)

    y_ref = channel_shuffle_ref(x, g)
    assert y.shape == (B, C, H, W)
    assert y.dtype == x.dtype
    assert jnp.array_equal(y, y_ref), "Pallas ChannelShuffle mismatch vs reference"

    print("KERNEL_OK")
</pallas_src>

<mosaic_0001>
module attributes {stable_mosaic.version = 11 : i64} {
  func.func @kernel(%arg0: memref<2x4x256xf32, #tpu.memory_space<any>>, %arg1: memref<2x2x512xf32, #tpu.memory_space<any>>, %arg2: memref<2x2x!tpu.dma_semaphore, #tpu.memory_space<semaphore_mem>>) attributes {dimension_semantics = [], scalar_prefetch = 0 : i64, scratch_operands = 1 : i64, tpu.core_type = #tpu.core_type<tc>} {
    %c0_i32 = arith.constant 0 : i32
    %c0_i32_0 = arith.constant 0 : i32
    %c0_i32_1 = arith.constant 0 : i32
    %c0_i32_2 = arith.constant 0 : i32
    %c0_i32_3 = arith.constant 0 : i32
    %0 = tpu.memref_slice %arg0[%c0_i32_1, %c0_i32_2, %c0_i32_3] : memref<2x4x256xf32, #tpu.memory_space<any>> -> memref<2x1x256xf32, #tpu.memory_space<any>>
    %c0_i32_4 = arith.constant 0 : i32
    %c0_i32_5 = arith.constant 0 : i32
    %c0_i32_6 = arith.constant 0 : i32
    %1 = tpu.memref_slice %arg1[%c0_i32_4, %c0_i32_5, %c0_i32_6] : memref<2x2x512xf32, #tpu.memory_space<any>> -> memref<2x1x256xf32, #tpu.memory_space<any>>
    %2 = tpu.memref_slice %arg2[%c0_i32, %c0_i32_0] : memref<2x2x!tpu.dma_semaphore, #tpu.memory_space<semaphore_mem>> -> memref<1x1x!tpu.dma_semaphore, #tpu.memory_space<semaphore_mem>>
    %3 = tpu.memref_squeeze %2 : memref<1x1x!tpu.dma_semaphore, #tpu.memory_space<semaphore_mem>> -> memref<!tpu.dma_semaphore, #tpu.memory_space<semaphore_mem>>
    tpu.enqueue_dma source(%0 : memref<2x1x256xf32, #tpu.memory_space<any>>) target(%1 : memref<2x1x256xf32, #tpu.memory_space<any>>) target_semaphore(%3 : memref<!tpu.dma_semaphore, #tpu.memory_space<semaphore_mem>>)
    %c0_i32_7 = arith.constant 0 : i32
    %c1_i32 = arith.constant 1 : i32
    %c0_i32_8 = arith.constant 0 : i32
    %c1_i32_9 = arith.constant 1 : i32
    %c0_i32_10 = arith.constant 0 : i32
    %4 = tpu.memref_slice %arg0[%c0_i32_8, %c1_i32_9, %c0_i32_10] : memref<2x4x256xf32, #tpu.memory_space<any>> -> memref<2x1x256xf32, #tpu.memory_space<any>>
    %c0_i32_11 = arith.constant 0 : i32
    %c1_i32_12 = arith.constant 1 : i32
    %c0_i32_13 = arith.constant 0 : i32
    %5 = tpu.memref_slice %arg1[%c0_i32_11, %c1_i32_12, %c0_i32_13] : memref<2x2x512xf32, #tpu.memory_space<any>> -> memref<2x1x256xf32, #tpu.memory_space<any>>
    %6 = tpu.memref_slice %arg2[%c0_i32_7, %c1_i32] : memref<2x2x!tpu.dma_semaphore, #tpu.memory_space<semaphore_mem>> -> memref<1x1x!tpu.dma_semaphore, #tpu.memory_space<semaphore_mem>>
    %7 = tpu.memref_squeeze %6 : memref<1x1x!tpu.dma_semaphore, #tpu.memory_space<semaphore_mem>> -> memref<!tpu.dma_semaphore, #tpu.memory_space<semaphore_mem>>
    tpu.enqueue_dma source(%4 : memref<2x1x256xf32, #tpu.memory_space<any>>) target(%5 : memref<2x1x256xf32, #tpu.memory_space<any>>) target_semaphore(%7 : memref<!tpu.dma_semaphore, #tpu.memory_space<semaphore_mem>>)
    %c1_i32_14 = arith.constant 1 : i32
    %c0_i32_15 = arith.constant 0 : i32
    %c0_i32_16 = arith.constant 0 : i32
    %c2_i32 = arith.constant 2 : i32
    %c0_i32_17 = arith.constant 0 : i32
    %8 = tpu.memref_slice %arg0[%c0_i32_16, %c2_i32, %c0_i32_17] : memref<2x4x256xf32, #tpu.memory_space<any>> -> memref<2x1x256xf32, #tpu.memory_space<any>>
    %c0_i32_18 = arith.constant 0 : i32
    %c0_i32_19 = arith.constant 0 : i32
    %c256_i32 = arith.constant 256 : i32
    %9 = tpu.memref_slice %arg1[%c0_i32_18, %c0_i32_19, %c256_i32] : memref<2x2x512xf32, #tpu.memory_space<any>> -> memref<2x1x256xf32, #tpu.memory_space<any>>
    %10 = tpu.memref_slice %arg2[%c1_i32_14, %c0_i32_15] : memref<2x2x!tpu.dma_semaphore, #tpu.memory_space<semaphore_mem>> -> memref<1x1x!tpu.dma_semaphore, #tpu.memory_space<semaphore_mem>>
    %11 = tpu.memref_squeeze %10 : memref<1x1x!tpu.dma_semaphore, #tpu.memory_space<semaphore_mem>> -> memref<!tpu.dma_semaphore, #tpu.memory_space<semaphore_mem>>
    tpu.enqueue_dma source(%8 : memref<2x1x256xf32, #tpu.memory_space<any>>) target(%9 : memref<2x1x256xf32, #tpu.memory_space<any>>) target_semaphore(%11 : memref<!tpu.dma_semaphore, #tpu.memory_space<semaphore_mem>>)
    %c1_i32_20 = arith.constant 1 : i32
    %c1_i32_21 = arith.constant 1 : i32
    %c0_i32_22 = arith.constant 0 : i32
    %c3_i32 = arith.constant 3 : i32
    %c0_i32_23 = arith.constant 0 : i32
    %12 = tpu.memref_slice %arg0[%c0_i32_22, %c3_i32, %c0_i32_23] : memref<2x4x256xf32, #tpu.memory_space<any>> -> memref<2x1x256xf32, #tpu.memory_space<any>>
    %c0_i32_24 = arith.constant 0 : i32
    %c1_i32_25 = arith.constant 1 : i32
    %c256_i32_26 = arith.constant 256 : i32
    %13 = tpu.memref_slice %arg1[%c0_i32_24, %c1_i32_25, %c256_i32_26] : memref<2x2x512xf32, #tpu.memory_space<any>> -> memref<2x1x256xf32, #tpu.memory_space<any>>
    %14 = tpu.memref_slice %arg2[%c1_i32_20, %c1_i32_21] : memref<2x2x!tpu.dma_semaphore, #tpu.memory_space<semaphore_mem>> -> memref<1x1x!tpu.dma_semaphore, #tpu.memory_space<semaphore_mem>>
    %15 = tpu.memref_squeeze %14 : memref<1x1x!tpu.dma_semaphore, #tpu.memory_space<semaphore_mem>> -> memref<!tpu.dma_semaphore, #tpu.memory_space<semaphore_mem>>
    tpu.enqueue_dma source(%12 : memref<2x1x256xf32, #tpu.memory_space<any>>) target(%13 : memref<2x1x256xf32, #tpu.memory_space<any>>) target_semaphore(%15 : memref<!tpu.dma_semaphore, #tpu.memory_space<semaphore_mem>>)
    %c0_i32_27 = arith.constant 0 : i32
    %c0_i32_28 = arith.constant 0 : i32
    %c0_i32_29 = arith.constant 0 : i32
    %c0_i32_30 = arith.constant 0 : i32
    %c0_i32_31 = arith.constant 0 : i32
    %16 = tpu.memref_slice %arg0[%c0_i32_29, %c0_i32_30, %c0_i32_31] : memref<2x4x256xf32, #tpu.memory_space<any>> -> memref<2x1x256xf32, #tpu.memory_space<any>>
    %c0_i32_32 = arith.constant 0 : i32
    %c0_i32_33 = arith.constant 0 : i32
    %c0_i32_34 = arith.constant 0 : i32
    %17 = tpu.memref_slice %arg1[%c0_i32_32, %c0_i32_33, %c0_i32_34] : memref<2x2x512xf32, #tpu.memory_space<any>> -> memref<2x1x256xf32, #tpu.memory_space<any>>
    %18 = tpu.memref_slice %arg2[%c0_i32_27, %c0_i32_28] : memref<2x2x!tpu.dma_semaphore, #tpu.memory_space<semaphore_mem>> -> memref<1x1x!tpu.dma_semaphore, #tpu.memory_space<semaphore_mem>>
    %19 = tpu.memref_squeeze %18 : memref<1x1x!tpu.dma_semaphore, #tpu.memory_space<semaphore_mem>> -> memref<!tpu.dma_semaphore, #tpu.memory_space<semaphore_mem>>
    tpu.wait_dma2 semaphore(%19 : memref<!tpu.dma_semaphore, #tpu.memory_space<semaphore_mem>>) src(%16 : memref<2x1x256xf32, #tpu.memory_space<any>>) dst(%17 : memref<2x1x256xf32, #tpu.memory_space<any>>)
    %c0_i32_35 = arith.constant 0 : i32
    %c1_i32_36 = arith.constant 1 : i32
    %c0_i32_37 = arith.constant 0 : i32
    %c1_i32_38 = arith.constant 1 : i32
    %c0_i32_39 = arith.constant 0 : i32
    %20 = tpu.memref_slice %arg0[%c0_i32_37, %c1_i32_38, %c0_i32_39] : memref<2x4x256xf32, #tpu.memory_space<any>> -> memref<2x1x256xf32, #tpu.memory_space<any>>
    %c0_i32_40 = arith.constant 0 : i32
    %c1_i32_41 = arith.constant 1 : i32
    %c0_i32_42 = arith.constant 0 : i32
    %21 = tpu.memref_slice %arg1[%c0_i32_40, %c1_i32_41, %c0_i32_42] : memref<2x2x512xf32, #tpu.memory_space<any>> -> memref<2x1x256xf32, #tpu.memory_space<any>>
    %22 = tpu.memref_slice %arg2[%c0_i32_35, %c1_i32_36] : memref<2x2x!tpu.dma_semaphore, #tpu.memory_space<semaphore_mem>> -> memref<1x1x!tpu.dma_semaphore, #tpu.memory_space<semaphore_mem>>
    %23 = tpu.memref_squeeze %22 : memref<1x1x!tpu.dma_semaphore, #tpu.memory_space<semaphore_mem>> -> memref<!tpu.dma_semaphore, #tpu.memory_space<semaphore_mem>>
    tpu.wait_dma2 semaphore(%23 : memref<!tpu.dma_semaphore, #tpu.memory_space<semaphore_mem>>) src(%20 : memref<2x1x256xf32, #tpu.memory_space<any>>) dst(%21 : memref<2x1x256xf32, #tpu.memory_space<any>>)
    %c1_i32_43 = arith.constant 1 : i32
    %c0_i32_44 = arith.constant 0 : i32
    %c0_i32_45 = arith.constant 0 : i32
    %c2_i32_46 = arith.constant 2 : i32
    %c0_i32_47 = arith.constant 0 : i32
    %24 = tpu.memref_slice %arg0[%c0_i32_45, %c2_i32_46, %c0_i32_47] : memref<2x4x256xf32, #tpu.memory_space<any>> -> memref<2x1x256xf32, #tpu.memory_space<any>>
    %c0_i32_48 = arith.constant 0 : i32
    %c0_i32_49 = arith.constant 0 : i32
    %c256_i32_50 = arith.constant 256 : i32
    %25 = tpu.memref_slice %arg1[%c0_i32_48, %c0_i32_49, %c256_i32_50] : memref<2x2x512xf32, #tpu.memory_space<any>> -> memref<2x1x256xf32, #tpu.memory_space<any>>
    %26 = tpu.memref_slice %arg2[%c1_i32_43, %c0_i32_44] : memref<2x2x!tpu.dma_semaphore, #tpu.memory_space<semaphore_mem>> -> memref<1x1x!tpu.dma_semaphore, #tpu.memory_space<semaphore_mem>>
    %27 = tpu.memref_squeeze %26 : memref<1x1x!tpu.dma_semaphore, #tpu.memory_space<semaphore_mem>> -> memref<!tpu.dma_semaphore, #tpu.memory_space<semaphore_mem>>
    tpu.wait_dma2 semaphore(%27 : memref<!tpu.dma_semaphore, #tpu.memory_space<semaphore_mem>>) src(%24 : memref<2x1x256xf32, #tpu.memory_space<any>>) dst(%25 : memref<2x1x256xf32, #tpu.memory_space<any>>)
    %c1_i32_51 = arith.constant 1 : i32
    %c1_i32_52 = arith.constant 1 : i32
    %c0_i32_53 = arith.constant 0 : i32
    %c3_i32_54 = arith.constant 3 : i32
    %c0_i32_55 = arith.constant 0 : i32
    %28 = tpu.memref_slice %arg0[%c0_i32_53, %c3_i32_54, %c0_i32_55] : memref<2x4x256xf32, #tpu.memory_space<any>> -> memref<2x1x256xf32, #tpu.memory_space<any>>
    %c0_i32_56 = arith.constant 0 : i32
    %c1_i32_57 = arith.constant 1 : i32
    %c256_i32_58 = arith.constant 256 : i32
    %29 = tpu.memref_slice %arg1[%c0_i32_56, %c1_i32_57, %c256_i32_58] : memref<2x2x512xf32, #tpu.memory_space<any>> -> memref<2x1x256xf32, #tpu.memory_space<any>>
    %30 = tpu.memref_slice %arg2[%c1_i32_51, %c1_i32_52] : memref<2x2x!tpu.dma_semaphore, #tpu.memory_space<semaphore_mem>> -> memref<1x1x!tpu.dma_semaphore, #tpu.memory_space<semaphore_mem>>
    %31 = tpu.memref_squeeze %30 : memref<1x1x!tpu.dma_semaphore, #tpu.memory_space<semaphore_mem>> -> memref<!tpu.dma_semaphore, #tpu.memory_space<semaphore_mem>>
    tpu.wait_dma2 semaphore(%31 : memref<!tpu.dma_semaphore, #tpu.memory_space<semaphore_mem>>) src(%28 : memref<2x1x256xf32, #tpu.memory_space<any>>) dst(%29 : memref<2x1x256xf32, #tpu.memory_space<any>>)
    return
  }
}

</mosaic_0001>

<llo_original>
// kernel: tpu_custom_call.1
$region0: #{tpu_custom_call.1}
  #allocation0 [shape = 'u32[]', space=smem, size = 0x4, offset = 0x4, fixed_abs, tag = 'smem constant byte address 0x4 - core index']
  #allocation1 [shape = 'u32[144,128]{1,0:T(1,128)}', space=vmem, size = 0x12000, scoped, tag = 'internal scratch']
  #allocation2 [shape = 's32[4]{0}', space=sflag, size = 0x10, scoped, tag = 'scratch operand']
  #allocation3 [shape = 's32[]', space=sflag, size = 0x4, offset = 0, fixed_abs, tag = 'sflag constant byte address 0x0 - dummy sync flag']
  #allocation5 [shape = 's32[]', space=sflag, size = 0x4, offset = 0, fixed_abs, tag = 'sflag constant byte address 0x0 - dummy sync flag']
  #allocation7 [shape = 's32[]', space=sflag, size = 0x4, offset = 0, fixed_abs, tag = 'sflag constant byte address 0x0 - dummy sync flag']
  #allocation9 [shape = 's32[]', space=sflag, size = 0x4, offset = 0, fixed_abs, tag = 'sflag constant byte address 0x0 - dummy sync flag']
  %s0 = inlined_call_operand.hbm [shape: f32[2,4,256], index: 0, kind: input, shape index: {}]
  %s1 = inlined_call_operand.hbm [shape: f32[2,2,512], index: 1, kind: output, shape index: {}]
  %s2 = sld [smem:[#allocation0]]
  $region2: #{tpu_custom_call.1} parent=0
    _
  %s4 = ssub.s32 1, %s2
  %s5 = scalar_select 0, %s4, %s2
  $region1: #{tpu_custom_call.1} parent=0
    #allocation4 [shape = 'u32[6]{0}', space=smem, size = 0x18, scoped, tag = 'DMA stride descriptor']
    #allocation6 [shape = 'u32[6]{0}', space=smem, size = 0x18, scoped, tag = 'DMA stride descriptor']
    #allocation8 [shape = 'u32[6]{0}', space=smem, size = 0x18, scoped, tag = 'DMA stride descriptor']
    #allocation10 [shape = 'u32[6]{0}', space=smem, size = 0x18, scoped, tag = 'DMA stride descriptor']
    %s7 = sshll.u32 1, 14
    %s8 = sxor.u32 4294967295, %s7
    %s11 = sshll.u32 3, 24
    %s12 = sxor.u32 4294967295, %s11
    %s13 = sand.u32 0, %s12
    %s15 = sor.u32 %s13, 0
    %18 = sst [smem:[#allocation4]] 128
    %s19 = scalar_lea.smem [#allocation4], 1
    %20 = sst [smem:[%s19]] 128
    %s21 = scalar_lea.smem [#allocation4], 2
    %22 = sst [smem:[%s21]] 2
    %s23 = scalar_lea.smem [#allocation4], 3
    %24 = sst [smem:[%s23]] 64
    %s25 = scalar_lea.smem [#allocation4], 4
    %26 = sst [smem:[%s25]] 32
    %s27 = scalar_lea.smem [#allocation4], 5
    %28 = sst [smem:[%s27]] 1
    %30 = dma.general %s0, 64, %s1, [#allocation2], [#allocation3], [#allocation4], %s15, 0
    %s31 = scalar_lea.hbm %s0, 16
    %s32 = scalar_lea.hbm %s1, 16
    %s33 = scalar_lea.sflag [#allocation2], 1
    %s35 = sshll.u32 1, 14
    %s36 = sxor.u32 4294967295, %s35
    %s39 = sshll.u32 3, 24
    %s40 = sxor.u32 4294967295, %s39
    %s41 = sand.u32 0, %s40
    %s43 = sor.u32 %s41, 0
    %46 = sst [smem:[#allocation6]] 128
    %s47 = scalar_lea.smem [#allocation6], 1
    %48 = sst [smem:[%s47]] 128
    %s49 = scalar_lea.smem [#allocation6], 2
    %50 = sst [smem:[%s49]] 2
    %s51 = scalar_lea.smem [#allocation6], 3
    %52 = sst [smem:[%s51]] 64
    %s53 = scalar_lea.smem [#allocation6], 4
    %54 = sst [smem:[%s53]] 32
    %s55 = scalar_lea.smem [#allocation6], 5
    %56 = sst [smem:[%s55]] 1
    %58 = dma.general %s31, 64, %s32, %s33, [#allocation5], [#allocation6], %s43, 0
    %s59 = scalar_lea.hbm %s0, 32
    %s60 = scalar_lea.hbm %s1, 64
    %s61 = scalar_lea.sflag [#allocation2], 2
    %s63 = sshll.u32 1, 14
    %s64 = sxor.u32 4294967295, %s63
    %s67 = sshll.u32 3, 24
    %s68 = sxor.u32 4294967295, %s67
    %s69 = sand.u32 0, %s68
    %s71 = sor.u32 %s69, 0
    %74 = sst [smem:[#allocation8]] 128
    %s75 = scalar_lea.smem [#allocation8], 1
    %76 = sst [smem:[%s75]] 128
    %s77 = scalar_lea.smem [#allocation8], 2
    %78 = sst [smem:[%s77]] 2
    %s79 = scalar_lea.smem [#allocation8], 3
    %80 = sst [smem:[%s79]] 64
    %s81 = scalar_lea.smem [#allocation8], 4
    %82 = sst [smem:[%s81]] 32
    %s83 = scalar_lea.smem [#allocation8], 5
    %84 = sst [smem:[%s83]] 1
    %86 = dma.general %s59, 64, %s60, %s61, [#allocation7], [#allocation8], %s71, 0
    %s87 = scalar_lea.hbm %s0, 48
    %s88 = scalar_lea.hbm %s1, 80
    %s89 = scalar_lea.sflag [#allocation2], 3
    %s91 = sshll.u32 1, 14
    %s92 = sxor.u32 4294967295, %s91
    %s95 = sshll.u32 3, 24
    %s96 = sxor.u32 4294967295, %s95
    %s97 = sand.u32 0, %s96
    %s99 = sor.u32 %s97, 0
    %102 = sst [smem:[#allocation10]] 128
    %s103 = scalar_lea.smem [#allocation10], 1
    %104 = sst [smem:[%s103]] 128
    %s105 = scalar_lea.smem [#allocation10], 2
    %106 = sst [smem:[%s105]] 2
    %s107 = scalar_lea.smem [#allocation10], 3
    %108 = sst [smem:[%s107]] 64
    %s109 = scalar_lea.smem [#allocation10], 4
    %110 = sst [smem:[%s109]] 32
    %s111 = scalar_lea.smem [#allocation10], 5
    %112 = sst [smem:[%s111]] 1
    %114 = dma.general %s87, 64, %s88, %s89, [#allocation9], [#allocation10], %s99, 0
    %s115 = smul.u32 2, 1
    %s116 = smul.u32 %s115, 2
    %s117 = sshll.u32 %s116, 4
    %118 = dma.done [#allocation2], %s117
    %s119 = sshll.u32 %s116, 4
    %120 = dma.done %s33, %s119
    %s121 = sshll.u32 %s116, 4
    %122 = dma.done %s61, %s121
    %s123 = sshll.u32 %s116, 4
    %124 = dma.done %s89, %s123
  %125 = vsyncmov [#allocation2]
  %s126 = vpop.sfrf %125
  %p127 = scmp.eq.s32.totalorder %s126, 0
  %p128 = pneg %p127
  %130 = shalt.err (%p128)
  %s131 = scalar_lea.sflag [#allocation2], 1
  %132 = vsyncmov %s131
  %s133 = vpop.sfrf %132
  %p134 = scmp.eq.s32.totalorder %s133, 0
  %p135 = pneg %p134
  %137 = shalt.err (%p135)
  %s138 = scalar_lea.sflag [#allocation2], 2
  %139 = vsyncmov %s138
  %s140 = vpop.sfrf %139
  %p141 = scmp.eq.s32.totalorder %s140, 0
  %p142 = pneg %p141
  %144 = shalt.err (%p142)
  %s145 = scalar_lea.sflag [#allocation2], 3
  %146 = vsyncmov %s145
  %s147 = vpop.sfrf %146
  %p148 = scmp.eq.s32.totalorder %s147, 0
  %p149 = pneg %p148
  %151 = shalt.err (%p149)

</llo_original>
